<compile_context>
chip_gen: v6e
topology: v6e:2x2x1
jax: 0.10.0
libtpu: 0.0.40
codegen_flags: <defaults>
</compile_context>

<pallas_src>
import functools

import jax
import jax.numpy as jnp
from jax.experimental import pallas as pl
from jax.experimental.pallas import tpu as pltpu

_LANE = 128  # lane granule (last dim)


def _round_up(x, m):
    return ((x + m - 1) // m) * m


def _pick_divisor_tile(dim_p, granule, target):
    """Largest tile (multiple of `granule`) that divides `dim_p` and is <= target.

    `dim_p` is already granule-padded.  If the whole dim fits under `target`
    it becomes a single block (no extra padding ever)."""
    if dim_p <= target:
        return dim_p
    ng = dim_p // granule
    max_tg = max(target // granule, 1)
    best = 1
    for t in range(1, max_tg + 1):
        if ng % t == 0:
            best = t
    return best * granule


def _rule_dense_kernel(x_ref, w_ref, o_ref):
    # x_ref: (tm, tk), w_ref: (tk, tn) pre-transposed weight, o_ref: (tm, tn) f32.
    # o_ref stays resident across the K grid axis (out index_map ignores kk),
    # so accumulate directly into it: no scratch, no finalize copy.
    @pl.when(pl.program_id(2) == 0)
    def _init():
        o_ref[...] = jnp.zeros_like(o_ref)

    o_ref[...] += jnp.dot(
        x_ref[...], w_ref[...], preferred_element_type=jnp.float32
    )


def prepare_rule_dense_weight(weight, *, precision="f32"):
    """One-time weight layout prep.

    Transposes W (num_neurons, input_size) -> (K, N), casts to the compute
    dtype and pads K/N to 128-lane granules.  Done once at init so no per-call
    HBM pad pass and no in-kernel transpose are needed.
    """
    weight = jnp.asarray(weight)
    n, k = weight.shape
    dtype = jnp.bfloat16 if precision == "bf16" else jnp.float32
    w_kn = weight.T.astype(dtype)
    k_p = _round_up(k, _LANE)
    n_p = _round_up(n, _LANE)
    if (k_p, n_p) != (k, n):
        w_kn = jnp.pad(w_kn, ((0, k_p - k), (0, n_p - n)))
    return w_kn


@functools.partial(
    jax.jit,
    static_argnums=(2,),
    static_argnames=("tm", "tn", "tk", "vmem_limit_bytes"),
)
def rule_dense_forward(x, w_kn, n_out, *, tm=512, tn=512, tk=1024,
                       vmem_limit_bytes=None):
    """ruleDense forward: y = x @ W.T (bias=False).

    x:     (batch, input_size)
    w_kn:  prepared weight from prepare_rule_dense_weight  (K_p, N_p)
    n_out: true num_neurons (static), returns (batch, num_neurons) float32.
    """
    m, k = x.shape
    k_p, n_p = w_kn.shape
    compute_dtype = w_kn.dtype
    assert k <= k_p, (k, k_p)

    # Sublane granule: 8 for f32, 16 for packed bf16.
    m_granule = 16 if compute_dtype == jnp.bfloat16 else 8
    m_p = _round_up(m, m_granule)

    # Tiles: granule-aligned divisors of the (already granule-padded) dims,
    # capped at the requested targets -> no pad-to-tile FLOP/HBM blowup.
    tm = _pick_divisor_tile(m_p, m_granule, tm)
    tn = _pick_divisor_tile(n_p, _LANE, tn)
    tk = _pick_divisor_tile(k_p, _LANE, tk)

    gm, gn, gk = m_p // tm, n_p // tn, k_p // tk

    # v7x megacore: M/N are the "parallel" (core-sharded) axes; make sure at
    # least one of them has >= 2 blocks when the problem allows it.
    if gm == 1 and gn == 1:
        n_granules = n_p // _LANE
        m_granules = m_p // m_granule
        for nb in (2, 4):
            if n_granules % nb == 0:
                tn = n_p // nb
                break
        else:
            for nb in (2, 4):
                if m_granules % nb == 0:
                    tm = m_p // nb
                    break
        gm, gn = m_p // tm, n_p // tn

    # Per-call work on x only: cast (no-op for f32) and granule-pad if needed.
    x = x.astype(compute_dtype)
    if (m_p != m) or (k_p != k):
        x = jnp.pad(x, ((0, m_p - m), (0, k_p - k)))

    out = pl.pallas_call(
        _rule_dense_kernel,
        out_shape=jax.ShapeDtypeStruct((m_p, n_p), jnp.float32),
        grid_spec=pltpu.PrefetchScalarGridSpec(
            num_scalar_prefetch=0,
            grid=(gm, gn, gk),
            in_specs=[
                pl.BlockSpec((tm, tk), lambda i, j, kk: (i, kk)),   # x tile
                pl.BlockSpec((tk, tn), lambda i, j, kk: (kk, j)),   # W (K,N) tile
            ],
            out_specs=pl.BlockSpec((tm, tn), lambda i, j, kk: (i, j)),
        ),
        compiler_params=pltpu.CompilerParams(
            dimension_semantics=("parallel", "parallel", "arbitrary"),
            vmem_limit_bytes=vmem_limit_bytes,
        ),
        cost_estimate=pl.CostEstimate(
            flops=2 * m * k * n_out,
            transcendentals=0,
            bytes_accessed=(x.dtype.itemsize * m * k
                            + w_kn.dtype.itemsize * k * n_out
                            + 4 * m * n_out),
        ),
    )(x, w_kn)

    if (m_p != m) or (n_p != n_out):
        out = out[:m, :n_out]
    return out


class RuleDense:
    """JAX/Pallas equivalent of ruleDense (bias=False, weight_constraint=None)."""

    def __init__(self, key, input_size, num_neurons, *, precision="f32",
                 tm=512, tn=512, tk=1024):
        self.input_size = input_size
        self.num_neurons = num_neurons
        self.tm, self.tn, self.tk = tm, tn, tk
        # nn.Linear kaiming-uniform U(-1/sqrt(in), 1/sqrt(in)), then abs()
        # because force_positive_init=True.
        bound = 1.0 / float(input_size) ** 0.5
        w = jax.random.uniform(key, (num_neurons, input_size),
                               dtype=jnp.float32, minval=-bound, maxval=bound)
        self.weight = jnp.abs(w)                      # reference (N, K) layout
        self.w_kn = prepare_rule_dense_weight(self.weight, precision=precision)

    def __call__(self, x):
        return rule_dense_forward(x, self.w_kn, self.num_neurons,
                                  tm=self.tm, tn=self.tn, tk=self.tk)


if __name__ == "__main__":
    key = jax.random.PRNGKey(0)
    kx, kw, kx2, kw2 = jax.random.split(key, 4)

    # Small demo shapes consistent with the module: batch=8, in=32, neurons=16.
    layer = RuleDense(kw, input_size=32, num_neurons=16)
    x = jax.random.normal(kx, (8, 32), dtype=jnp.float32)
    out = jax.block_until_ready(layer(x))
    ref = x @ layer.weight.T
    assert out.shape == (8, 16)
    assert jnp.allclose(out, ref, atol=1e-5, rtol=1e-5)

    # Unaligned mid-size shape: exercises granule-only padding, divisor tiles
    # and a multi-block (megacore-shardable) N grid.
    layer2 = RuleDense(kw2, input_size=700, num_neurons=520)
    x2 = jax.random.normal(kx2, (300, 700), dtype=jnp.float32)
    out2 = jax.block_until_ready(layer2(x2))
    ref2 = x2 @ layer2.weight.T
    assert out2.shape == (300, 520)
    assert jnp.allclose(out2, ref2, atol=1e-3, rtol=1e-4)

    # Optional bf16-input path (explicit opt-in; reference is f64 -> loose tol).
    layer3 = RuleDense(kw2, input_size=700, num_neurons=520, precision="bf16")
    out3 = jax.block_until_ready(layer3(x2))
    assert out3.shape == (300, 520)
    assert jnp.allclose(out3, ref2, atol=0.1, rtol=0.05)

    print("KERNEL_OK")
</pallas_src>

<mosaic_0001>
module attributes {stable_mosaic.version = 11 : i64} {
  func.func @_rule_dense_kernel(%arg0: i32, %arg1: i32, %arg2: i32, %arg3: memref<8x128xf32, #tpu.memory_space<vmem>>, %arg4: memref<128x128xf32, #tpu.memory_space<vmem>>, %arg5: memref<8x128xf32, #tpu.memory_space<vmem>>) attributes {dimension_semantics = [#tpu.dimension_semantics<parallel>, #tpu.dimension_semantics<parallel>, #tpu.dimension_semantics<arbitrary>], iteration_bounds = array<i64: 1, 1, 1>, scalar_prefetch = 0 : i64, scratch_operands = 0 : i64, tpu.core_type = #tpu.core_type<tc>, window_params = [{transform_indices = @transform_0, window_bounds = array<i64: 8, 128>}, {transform_indices = @transform_1, window_bounds = array<i64: 128, 128>}, {transform_indices = @transform_2, window_bounds = array<i64: 8, 128>}]} {
    %c0_i32 = arith.constant 0 : i32
    %0 = arith.cmpi eq, %arg2, %c0_i32 : i32
    %1 = arith.extui %0 : i1 to i32
    %c0_i32_0 = arith.constant 0 : i32
    %2 = arith.cmpi ne, %1, %c0_i32_0 : i32
    scf.if %2 {
      %cst_8 = arith.constant 0.000000e+00 : f32
      %9 = vector.broadcast %cst_8 : f32 to vector<8x128xf32>
      %c0_9 = arith.constant 0 : index
      %c0_10 = arith.constant 0 : index
      %10 = vector.load %arg5[%c0_9, %c0_10] : memref<8x128xf32, #tpu.memory_space<vmem>>, vector<8x128xf32>
      tpu.vector_store %arg5[%c0_9, %c0_10], %9 {strides = array<i32>} : memref<8x128xf32, #tpu.memory_space<vmem>>, vector<8x128xf32>,
    } else {
    }
    %c0 = arith.constant 0 : index
    %c0_1 = arith.constant 0 : index
    %3 = vector.load %arg5[%c0, %c0_1] : memref<8x128xf32, #tpu.memory_space<vmem>>, vector<8x128xf32>
    %c0_2 = arith.constant 0 : index
    %c0_3 = arith.constant 0 : index
    %4 = vector.load %arg3[%c0_2, %c0_3] : memref<8x128xf32, #tpu.memory_space<vmem>>, vector<8x128xf32>
    %c0_4 = arith.constant 0 : index
    %c0_5 = arith.constant 0 : index
    %5 = vector.load %arg4[%c0_4, %c0_5] : memref<128x128xf32, #tpu.memory_space<vmem>>, vector<128x128xf32>
    %cst = arith.constant dense<0.000000e+00> : vector<8x128xf32>
    %6 = tpu.matmul %4, %5, %cst {dimension_numbers = #tpu.dot_dimension_numbers<[1], [0], [0], [1], [0, 0, 1, 1], [], []>} : vector<8x128xf32>, vector<128x128xf32>, vector<8x128xf32> -> vector<8x128xf32>
    %7 = arith.addf %3, %6 : vector<8x128xf32>
    %c0_6 = arith.constant 0 : index
    %c0_7 = arith.constant 0 : index
    %8 = vector.load %arg5[%c0_6, %c0_7] : memref<8x128xf32, #tpu.memory_space<vmem>>, vector<8x128xf32>
    tpu.vector_store %arg5[%c0_6, %c0_7], %7 {strides = array<i32>} : memref<8x128xf32, #tpu.memory_space<vmem>>, vector<8x128xf32>,
    return
  }
  func.func @transform_0(%arg0: i32, %arg1: i32, %arg2: i32) -> (i32, i32) {
    %c0_i32 = arith.constant 0 : i32
    return %arg0, %arg2 : i32, i32
  }
  func.func @transform_1(%arg0: i32, %arg1: i32, %arg2: i32) -> (i32, i32) {
    %c0_i32 = arith.constant 0 : i32
    return %arg2, %arg1 : i32, i32
  }
  func.func @transform_2(%arg0: i32, %arg1: i32, %arg2: i32) -> (i32, i32) {
    %c0_i32 = arith.constant 0 : i32
    return %arg0, %arg1 : i32, i32
  }
}

</mosaic_0001>

<llo_original>
// kernel: rule_dense_forward.1
$region0: #{rule_dense_forward.1}
  #allocation0 [shape = 'u32[]', space=smem, size = 0x4, offset = 0x4, fixed_abs, tag = 'smem constant byte address 0x4 - core index']
  #allocation1 [shape = 'u32[144,128]{1,0:T(1,128)}', space=vmem, size = 0x12000, scoped, tag = 'internal scratch']
  %s0 = inlined_call_operand.vmem [shape: f32[8,128], index: 0, kind: input, shape index: {}]
  %s1 = inlined_call_operand.hbm [shape: f32[128,128], index: 1, kind: input, shape index: {}]
  %s2 = inlined_call_operand.hbm [shape: f32[8,128], index: 2, kind: output, shape index: {}]
  %s3 = sld [smem:[#allocation0]]
  $region26: #{rule_dense_forward.1} parent=0
    _
  %s5 = ssub.s32 1, %s3
  %s6 = scalar_select 0, %s5, %s3
  $region1: #{rule_dense_forward.1} parent=0
    #allocation2 [shape = 'u8[65536]{0}', space=vmem, size = 0x10000, scoped, tag = 'input window, operand 1, single buffered']
    #allocation3 [shape = 's32[1]{0}', space=sflag, size = 0x4, scoped, tag = 'scoped memory for rule_dense_forward.1']
    #allocation4 [shape = 's32[1]{0}', space=sflag, size = 0x4, scoped, tag = 'scoped memory for rule_dense_forward.1']
    #allocation5 [shape = 'u8[4096]{0}', space=vmem, size = 0x1000, scoped, tag = 'output window, operand 0, single buffered']
    %7 = vsyncpa [#allocation3], 0
    %8 = vsyncpa [#allocation4], 0
    // Predicated region
    $region2: #{rule_dense_forward.1} parent=1 // pred_check
      _
    $region3: #{rule_dense_forward.1} parent=1 // pred_check_branch
      %10 = sbr.rel (0) target = $region5
    $region4: #{rule_dense_forward.1} parent=1 // pred_region
      _
    $region5: #{rule_dense_forward.1} parent=1 // pred_fallthru
      _
    // Predicated region
    $region6: #{rule_dense_forward.1} parent=1 // pred_check
      _
    $region7: #{rule_dense_forward.1} parent=1 // pred_check_branch
      %12 = sbr.rel (0) target = $region9
    $region8: #{rule_dense_forward.1} parent=1 // pred_region
      %s14 = ssub.s32 2048, 2048
      %15 = vsyncadd [#allocation3], %s14
      %s16 = sshll.u32 [#allocation2], 4
      %s17 = int_to_ptr.vmem [resolvable:$true] %s16
      %22 = dma.hbm_to_vmem [thread:$0]  %s1, 2048, %s17, [#allocation3], 128, 128, 8
    $region9: #{rule_dense_forward.1} parent=1 // pred_fallthru
      _
    // Predicated region
    $region10: #{rule_dense_forward.1} parent=1 // pred_check
      _
    $region11: #{rule_dense_forward.1} parent=1 // pred_check_branch
      %24 = sbr.rel (0) target = $region13
    $region12: #{rule_dense_forward.1} parent=1 // pred_region
      %25 = dma.done [#allocation3], 2048
    $region13: #{rule_dense_forward.1} parent=1 // pred_fallthru
      _
    %p26 = scmp.eq.s32.totalorder 0, 0
    // Predicated region
    $region14: #{rule_dense_forward.1} parent=1 // pred_check
      %p27 = pneg %p26
    $region15: #{rule_dense_forward.1} parent=1 // pred_check_branch
      %29 = sbr.rel (%p27) target = $region17
    $region16: #{rule_dense_forward.1} parent=1 // pred_region
      %30 = vst [vmem:[#allocation5] sm:$0xff] 0.0
    $region17: #{rule_dense_forward.1} parent=1 // pred_fallthru
      _
    %v31 = vld [vmem:[#allocation5] sm:$0xff]
    %v32 = vld [vmem:[%s0] sm:$0xff]
    %v33 = vld [vmem:[#allocation2] sm:$0xff]
    %v34 = vld [vmem:[#allocation2 + $0x8] sm:$0xff]
    %v35 = vld [vmem:[#allocation2 + $0x10] sm:$0xff]
    %v36 = vld [vmem:[#allocation2 + $0x18] sm:$0xff]
    %v37 = vld [vmem:[#allocation2 + $0x20] sm:$0xff]
    %v38 = vld [vmem:[#allocation2 + $0x28] sm:$0xff]
    %v39 = vld [vmem:[#allocation2 + $0x30] sm:$0xff]
    %v40 = vld [vmem:[#allocation2 + $0x38] sm:$0xff]
    %v41 = vld [vmem:[#allocation2 + $0x40] sm:$0xff]
    %v42 = vld [vmem:[#allocation2 + $0x48] sm:$0xff]
    %v43 = vld [vmem:[#allocation2 + $0x50] sm:$0xff]
    %v44 = vld [vmem:[#allocation2 + $0x58] sm:$0xff]
    %v45 = vld [vmem:[#allocation2 + $0x60] sm:$0xff]
    %v46 = vld [vmem:[#allocation2 + $0x68] sm:$0xff]
    %v47 = vld [vmem:[#allocation2 + $0x70] sm:$0xff]
    %v48 = vld [vmem:[#allocation2 + $0x78] sm:$0xff]
    %49 = vmatprep.subr.mxu0 0.0
    %50 = vmatpush1.msra.mxu0 %v48
    %51 = vmatprep.subr.mxu0 0.0
    %52 = vmatpush1.msra.mxu0 %v47
    %53 = vmatprep.subr.mxu0 0.0
    %54 = vmatpush1.msra.mxu0 %v46
    %55 = vmatprep.subr.mxu0 0.0
    %56 = vmatpush1.msra.mxu0 %v45
    %57 = vmatprep.subr.mxu0 0.0
    %58 = vmatpush1.msra.mxu0 %v44
    %59 = vmatprep.subr.mxu0 0.0
    %60 = vmatpush1.msra.mxu0 %v43
    %61 = vmatprep.subr.mxu0 0.0
    %62 = vmatpush1.msra.mxu0 %v42
    %63 = vmatprep.subr.mxu0 0.0
    %64 = vmatpush1.msra.mxu0 %v41
    %65 = vmatprep.subr.mxu0 0.0
    %66 = vmatpush1.msra.mxu0 %v40
    %67 = vmatprep.subr.mxu0 0.0
    %68 = vmatpush1.msra.mxu0 %v39
    %69 = vmatprep.subr.mxu0 0.0
    %70 = vmatpush1.msra.mxu0 %v38
    %71 = vmatprep.subr.mxu0 0.0
    %72 = vmatpush1.msra.mxu0 %v37
    %73 = vmatprep.subr.mxu0 0.0
    %74 = vmatpush1.msra.mxu0 %v36
    %75 = vmatprep.subr.mxu0 0.0
    %76 = vmatpush1.msra.mxu0 %v35
    %77 = vmatprep.subr.mxu0 0.0
    %78 = vmatpush1.msra.mxu0 %v34
    %79 = vmatprep.subr.mxu0 0.0
    %80 = vmatpush1.msra.mxu0 %v33
    %81 = vmatprep.subr.mxu0 0.0
    %82 = vmatpush2.msra.mxu0 0.0
    %83 = vmatprep.subr.mxu0 0.0
    %84 = vmatpush2.msra.mxu0 0.0
    %85 = vmatprep.subr.mxu0 0.0
    %86 = vmatpush2.msra.mxu0 0.0
    %87 = vmatprep.subr.mxu0 0.0
    %88 = vmatpush2.msra.mxu0 0.0
    %89 = vmatprep.subr.mxu0 0.0
    %90 = vmatpush2.msra.mxu0 0.0
    %91 = vmatprep.subr.mxu0 0.0
    %92 = vmatpush2.msra.mxu0 0.0
    %93 = vmatprep.subr.mxu0 0.0
    %94 = vmatpush2.msra.mxu0 0.0
    %95 = vmatprep.subr.mxu0 0.0
    %96 = vmatpush2.msra.mxu0 0.0
    %97 = vmatprep.subr.mxu0 0.0
    %98 = vmatpush2.msra.mxu0 0.0
    %99 = vmatprep.subr.mxu0 0.0
    %100 = vmatpush2.msra.mxu0 0.0
    %101 = vmatprep.subr.mxu0 0.0
    %102 = vmatpush2.msra.mxu0 0.0
    %103 = vmatprep.subr.mxu0 0.0
    %104 = vmatpush2.msra.mxu0 0.0
    %105 = vmatprep.subr.mxu0 0.0
    %106 = vmatpush2.msra.mxu0 0.0
    %107 = vmatprep.subr.mxu0 0.0
    %108 = vmatpush2.msra.mxu0 0.0
    %109 = vmatprep.subr.mxu0 0.0
    %110 = vmatpush2.msra.mxu0 0.0
    %111 = vmatprep.subr.mxu0 0.0
    %112 = vmatpush2.msra.mxu0 0.0
    %113 = vmatprep.mubr.f32.mxu0 0.0
    %114 = vmatmul.mubr.f32.gmra.mxu0 %v32
    %v115 = vpop.f32.mrf.mxu0
    %v116 = vadd.f32 0.0, %v115
    %v117 = vpop.f32.mrf.mxu0
    %118 = vdwg.mxu0
    %v119 = vadd.f32 %v31, %v116
    %120 = vst [vmem:[#allocation5] sm:$0xff] %v119
    // Predicated region
    $region18: #{rule_dense_forward.1} parent=1 // pred_check
      _
    $region19: #{rule_dense_forward.1} parent=1 // pred_check_branch
      %122 = sbr.rel (0) target = $region21
    $region20: #{rule_dense_forward.1} parent=1 // pred_region
      %s124 = ssub.s32 128, 128
      %125 = vsyncadd [#allocation4], %s124
      %s127 = sshll.u32 [#allocation5], 4
      %s128 = int_to_ptr.vmem [resolvable:$true] %s127
      %130 = dma.vmem_to_hbm [thread:$0]  %s128, 128, %s2, [#allocation4]
    $region21: #{rule_dense_forward.1} parent=1 // pred_fallthru
      _
    // Predicated region
    $region22: #{rule_dense_forward.1} parent=1 // pred_check
      _
    $region23: #{rule_dense_forward.1} parent=1 // pred_check_branch
      %132 = sbr.rel (0) target = $region25
    $region24: #{rule_dense_forward.1} parent=1 // pred_region
      %133 = dma.done [#allocation4], 128
    $region25: #{rule_dense_forward.1} parent=1 // pred_fallthru
      _
    %134 = vsyncpa [#allocation3], 1
    %135 = vsyncpa [#allocation4], 1

</llo_original>
